<compile_context>
chip_gen: v6e
topology: v6e:2x2x1
jax: 0.10.0
libtpu: 0.0.40
codegen_flags: <defaults>
</compile_context>

<pallas_src>
import functools

import jax
import jax.numpy as jnp
from jax.experimental import pallas as pl
from jax.experimental.pallas import tpu as pltpu

LMAX = 2
NUM_SH = (LMAX + 1) ** 2  # 9
_SQRT3 = 3.0 ** 0.5
_EPS = 1e-12  # torch.nn.functional.normalize default eps

_LANE = 128
_SUB = 8


def _sh_kernel(vec_ref, out_ref):
    """vec_ref: (3, R, 128) f32 ; out_ref: (NUM_SH, R, 128) f32."""
    R = vec_ref.shape[1]

    # Strip-mine the elementwise body over row chunks so the live set per iteration
    # (x, y, z, inv, x2, y2, z2 + a couple of temps) stays far below 64 vregs even for
    # R=512..1024 blocks; stores-as-you-go end each value's live range.
    chunk = R
    for c in (32, 16, 8):
        if R % c == 0:
            chunk = c
            break
    n_chunks = R // chunk

    def body(i, carry):
        r0 = pl.multiple_of(i * chunk, chunk)
        rs = pl.ds(r0, chunk)
        x = vec_ref[0, rs, :]
        y = vec_ref[1, rs, :]
        z = vec_ref[2, rs, :]

        # normalize=True: L2-normalize the edge vector. Clamping the *squared* norm with
        # eps^2 matches clamping the norm with eps except when ||v||^2 underflows in f32
        # (||v|| <~ 1e-19) -- both paths then clamp and stay finite. rsqrt -> EUP slot.
        norm2 = x * x + y * y + z * z
        inv = jax.lax.rsqrt(jnp.maximum(norm2, _EPS * _EPS))
        x = x * inv
        y = y * inv
        z = z * inv

        x2 = x * x
        y2 = y * y
        z2 = z * z

        # e3nn component basis / sqrt(2l+1)  ('norm' normalization), written as computed.
        out_ref[0, rs, :] = jnp.ones_like(x)            # l=0
        out_ref[1, rs, :] = x                           # l=1
        out_ref[2, rs, :] = y
        out_ref[3, rs, :] = z
        out_ref[4, rs, :] = _SQRT3 * (x * z)            # l=2
        out_ref[5, rs, :] = _SQRT3 * (x * y)
        out_ref[6, rs, :] = y2 - 0.5 * (x2 + z2)
        out_ref[7, rs, :] = _SQRT3 * (y * z)
        out_ref[8, rs, :] = (0.5 * _SQRT3) * (z2 - x2)
        return carry

    jax.lax.fori_loop(0, n_chunks, body, 0, unroll=True)


def _rows_per_block(rows, tile_e):
    """Pick the rows-per-block R (sublane count of one grid step)."""
    if rows <= _SUB:
        return rows  # single full-extent block (exempt from the 8-divisibility rule)
    r_target = max(_SUB, ((tile_e // _LANE) // _SUB) * _SUB)
    # Keep >= 2 grid steps so v7x's two TensorCores both get work ("parallel" axis).
    r_half = max(_SUB, pl.cdiv(pl.cdiv(rows, 2), _SUB) * _SUB)
    return min(r_target, r_half)


def spherical_harmonic_edge_sh_major(pos, edge_index, *, tile_e=65536):
    """pos: (N, 3) f32, edge_index: (2, E) int -> edge_sh: (NUM_SH, E) f32 (sh-major)."""
    E = edge_index.shape[1]
    rows = pl.cdiv(E, _LANE)          # lane-only padding: at most 127 wasted edges
    e_pad = rows * _LANE
    R = _rows_per_block(rows, tile_e)
    grid = pl.cdiv(rows, R)           # ragged last block handled/masked by Pallas

    # Pad the *indices* (cheap int32 copy) so the gather directly produces the padded,
    # sublane-dense (3, rows, 128) layout; padded lanes give vec = pos[0]-pos[0] = 0,
    # which normalizes to finite junk and is sliced off below.
    idx = jnp.pad(edge_index.astype(jnp.int32), ((0, 0), (0, e_pad - E)))
    posT = pos.T.astype(jnp.float32)                         # (3, N), tiny
    vec3 = (posT[:, idx[1]] - posT[:, idx[0]]).reshape(3, rows, _LANE)
    # TODO(synk): fuse this gather into the kernel to avoid the (3, E) HBM round trip.

    out = pl.pallas_call(
        _sh_kernel,
        out_shape=jax.ShapeDtypeStruct((NUM_SH, rows, _LANE), jnp.float32),
        grid_spec=pltpu.PrefetchScalarGridSpec(
            num_scalar_prefetch=0,
            grid=(grid,),
            in_specs=[pl.BlockSpec((3, R, _LANE), lambda i: (0, i, 0))],
            out_specs=pl.BlockSpec((NUM_SH, R, _LANE), lambda i: (0, i, 0)),
        ),
        compiler_params=pltpu.CompilerParams(
            dimension_semantics=("parallel",),
            vmem_limit_bytes=32 * 1024 * 1024,   # headroom for tile_e up to 131072 on v5e
        ),
    )(vec3)

    # (9, rows*128) -> drop padded lanes. In a fused pipeline this slice (and any
    # transpose) should be left to the consumer so it fuses instead of re-touching HBM.
    return out.reshape(NUM_SH, e_pad)[:, :E]


@functools.partial(jax.jit, static_argnames=("tile_e", "sh_major"))
def spherical_harmonic_edge_angular_attrs(pos, edge_index, *, tile_e=65536, sh_major=False):
    """Module-equivalent entry point.

    sh_major=False (default) returns (E, NUM_SH) exactly like the PyTorch module.
    sh_major=True returns the transpose-free (NUM_SH, E) layout (preferred for consumers
    that can take it -- avoids the 36 B/edge transpose epilogue).
    """
    sh = spherical_harmonic_edge_sh_major(pos, edge_index, tile_e=tile_e)
    return sh if sh_major else sh.T


def _reference_sh(pos, edge_index):
    """Pure-JAX reference matching e3nn SphericalHarmonics(lmax=2, True, 'norm')."""
    ev = pos[edge_index[1]] - pos[edge_index[0]]
    n = jnp.sqrt(jnp.sum(ev * ev, axis=-1, keepdims=True))
    v = ev / jnp.maximum(n, _EPS)
    x, y, z = v[:, 0], v[:, 1], v[:, 2]
    return jnp.stack(
        [
            jnp.ones_like(x),
            x, y, z,
            _SQRT3 * x * z,
            _SQRT3 * x * y,
            y * y - 0.5 * (x * x + z * z),
            _SQRT3 * y * z,
            0.5 * _SQRT3 * (z * z - x * x),
        ],
        axis=-1,
    )


if __name__ == "__main__":
    key = jax.random.PRNGKey(0)
    k_pos, k_e1, k_e2, k_e3 = jax.random.split(key, 4)

    N_ATOMS = 16
    pos = jax.random.normal(k_pos, (N_ATOMS, 3), dtype=jnp.float32) * 2.0

    def make_edges(k, n_edges):
        ks, kd = jax.random.split(k)
        src = jax.random.randint(ks, (n_edges,), 0, N_ATOMS, dtype=jnp.int32)
        dst = jax.random.randint(kd, (n_edges,), 0, N_ATOMS, dtype=jnp.int32)
        return jnp.stack([src, dst], axis=0)

    # Small case: rows <= 8 -> single full-extent block (grid = 1).
    ei_small = make_edges(k_e1, 256)
    out_small = jax.block_until_ready(
        spherical_harmonic_edge_angular_attrs(pos, ei_small)
    )
    ref_small = _reference_sh(pos, ei_small)
    assert out_small.shape == (256, NUM_SH), out_small.shape
    assert jnp.allclose(out_small, ref_small, atol=1e-5, rtol=1e-5), "small mismatch"

    # sh-major (transpose-free) layout path.
    out_major = jax.block_until_ready(
        spherical_harmonic_edge_angular_attrs(pos, ei_small, sh_major=True)
    )
    assert out_major.shape == (NUM_SH, 256), out_major.shape
    assert jnp.allclose(out_major, ref_small.T, atol=1e-5, rtol=1e-5), "sh-major mismatch"

    # Medium case: rows = 10 -> R = 8, grid = 2 with a ragged (masked) last block.
    ei_med = make_edges(k_e2, 1200)
    out_med = jax.block_until_ready(spherical_harmonic_edge_angular_attrs(pos, ei_med))
    assert out_med.shape == (1200, NUM_SH)
    assert jnp.allclose(out_med, _reference_sh(pos, ei_med), atol=1e-5, rtol=1e-5), \
        "medium (ragged-block) mismatch"

    # Larger case: rows = 157 -> R = 80, grid = 2 (80 + 77-row ragged block),
    # strip-mined kernel body with 16-row chunks.
    ei_big = make_edges(k_e3, 20000)
    out_big = jax.block_until_ready(spherical_harmonic_edge_angular_attrs(pos, ei_big))
    assert out_big.shape == (20000, NUM_SH)
    assert jnp.allclose(out_big, _reference_sh(pos, ei_big), atol=1e-5, rtol=1e-5), \
        "big mismatch"

    print("KERNEL_OK")
</pallas_src>

<mosaic_0001>
module attributes {stable_mosaic.version = 11 : i64} {
  func.func @_sh_kernel(%arg0: i32, %arg1: memref<3x2x128xf32, #tpu.memory_space<vmem>>, %arg2: memref<9x2x128xf32, #tpu.memory_space<vmem>>) attributes {dimension_semantics = [#tpu.dimension_semantics<parallel>], iteration_bounds = array<i64: 1>, scalar_prefetch = 0 : i64, scratch_operands = 0 : i64, tpu.core_type = #tpu.core_type<tc>, window_params = [{transform_indices = @transform_0, window_bounds = array<i64: 3, 2, 128>}, {transform_indices = @transform_1, window_bounds = array<i64: 9, 2, 128>}]} {
    %c0_i32 = arith.constant 0 : i32
    %c2_i32 = arith.constant 2 : i32
    %0 = arith.muli %c0_i32, %c2_i32 : i32
    %1 = tpu.assume_multiple %0, 2 : i32
    %c0 = arith.constant 0 : index
    %2 = arith.index_cast %1 : i32 to index
    %c0_0 = arith.constant 0 : index
    %3 = vector.load %arg1[%c0, %2, %c0_0] : memref<3x2x128xf32, #tpu.memory_space<vmem>>, vector<1x2x128xf32>
    %4 = vector.shape_cast %3 : vector<1x2x128xf32> to vector<2x128xf32>
    %c1 = arith.constant 1 : index
    %5 = arith.index_cast %1 : i32 to index
    %c0_1 = arith.constant 0 : index
    %6 = vector.load %arg1[%c1, %5, %c0_1] : memref<3x2x128xf32, #tpu.memory_space<vmem>>, vector<1x2x128xf32>
    %7 = vector.shape_cast %6 : vector<1x2x128xf32> to vector<2x128xf32>
    %c2 = arith.constant 2 : index
    %8 = arith.index_cast %1 : i32 to index
    %c0_2 = arith.constant 0 : index
    %9 = vector.load %arg1[%c2, %8, %c0_2] : memref<3x2x128xf32, #tpu.memory_space<vmem>>, vector<1x2x128xf32>
    %10 = vector.shape_cast %9 : vector<1x2x128xf32> to vector<2x128xf32>
    %11 = arith.mulf %4, %4 : vector<2x128xf32>
    %12 = arith.mulf %7, %7 : vector<2x128xf32>
    %13 = arith.addf %11, %12 : vector<2x128xf32>
    %14 = arith.mulf %10, %10 : vector<2x128xf32>
    %15 = arith.addf %13, %14 : vector<2x128xf32>
    %cst = arith.constant 1.000000e-24 : f32
    %16 = vector.broadcast %cst : f32 to vector<2x128xf32>
    %17 = arith.maximumf %15, %16 : vector<2x128xf32>
    %18 = math.rsqrt %17 : vector<2x128xf32>
    %19 = arith.mulf %4, %18 : vector<2x128xf32>
    %20 = arith.mulf %7, %18 : vector<2x128xf32>
    %21 = arith.mulf %10, %18 : vector<2x128xf32>
    %22 = arith.mulf %19, %19 : vector<2x128xf32>
    %23 = arith.mulf %20, %20 : vector<2x128xf32>
    %24 = arith.mulf %21, %21 : vector<2x128xf32>
    %cst_3 = arith.constant 1.000000e+00 : f32
    %25 = vector.broadcast %cst_3 : f32 to vector<2x128xf32>
    %c0_4 = arith.constant 0 : index
    %26 = arith.index_cast %1 : i32 to index
    %c0_5 = arith.constant 0 : index
    %27 = vector.load %arg2[%c0_4, %26, %c0_5] : memref<9x2x128xf32, #tpu.memory_space<vmem>>, vector<1x2x128xf32>
    %28 = vector.shape_cast %27 : vector<1x2x128xf32> to vector<2x128xf32>
    %29 = vector.shape_cast %25 : vector<2x128xf32> to vector<1x2x128xf32>
    tpu.vector_store %arg2[%c0_4, %26, %c0_5], %29 {strides = array<i32>} : memref<9x2x128xf32, #tpu.memory_space<vmem>>, vector<1x2x128xf32>,
    %c1_6 = arith.constant 1 : index
    %30 = arith.index_cast %1 : i32 to index
    %c0_7 = arith.constant 0 : index
    %31 = vector.load %arg2[%c1_6, %30, %c0_7] : memref<9x2x128xf32, #tpu.memory_space<vmem>>, vector<1x2x128xf32>
    %32 = vector.shape_cast %31 : vector<1x2x128xf32> to vector<2x128xf32>
    %33 = vector.shape_cast %19 : vector<2x128xf32> to vector<1x2x128xf32>
    tpu.vector_store %arg2[%c1_6, %30, %c0_7], %33 {strides = array<i32>} : memref<9x2x128xf32, #tpu.memory_space<vmem>>, vector<1x2x128xf32>,
    %c2_8 = arith.constant 2 : index
    %34 = arith.index_cast %1 : i32 to index
    %c0_9 = arith.constant 0 : index
    %35 = vector.load %arg2[%c2_8, %34, %c0_9] : memref<9x2x128xf32, #tpu.memory_space<vmem>>, vector<1x2x128xf32>
    %36 = vector.shape_cast %35 : vector<1x2x128xf32> to vector<2x128xf32>
    %37 = vector.shape_cast %20 : vector<2x128xf32> to vector<1x2x128xf32>
    tpu.vector_store %arg2[%c2_8, %34, %c0_9], %37 {strides = array<i32>} : memref<9x2x128xf32, #tpu.memory_space<vmem>>, vector<1x2x128xf32>,
    %c3 = arith.constant 3 : index
    %38 = arith.index_cast %1 : i32 to index
    %c0_10 = arith.constant 0 : index
    %39 = vector.load %arg2[%c3, %38, %c0_10] : memref<9x2x128xf32, #tpu.memory_space<vmem>>, vector<1x2x128xf32>
    %40 = vector.shape_cast %39 : vector<1x2x128xf32> to vector<2x128xf32>
    %41 = vector.shape_cast %21 : vector<2x128xf32> to vector<1x2x128xf32>
    tpu.vector_store %arg2[%c3, %38, %c0_10], %41 {strides = array<i32>} : memref<9x2x128xf32, #tpu.memory_space<vmem>>, vector<1x2x128xf32>,
    %42 = arith.mulf %19, %21 : vector<2x128xf32>
    %cst_11 = arith.constant 1.73205078 : f32
    %43 = vector.broadcast %cst_11 : f32 to vector<2x128xf32>
    %44 = arith.mulf %43, %42 : vector<2x128xf32>
    %c4 = arith.constant 4 : index
    %45 = arith.index_cast %1 : i32 to index
    %c0_12 = arith.constant 0 : index
    %46 = vector.load %arg2[%c4, %45, %c0_12] : memref<9x2x128xf32, #tpu.memory_space<vmem>>, vector<1x2x128xf32>
    %47 = vector.shape_cast %46 : vector<1x2x128xf32> to vector<2x128xf32>
    %48 = vector.shape_cast %44 : vector<2x128xf32> to vector<1x2x128xf32>
    tpu.vector_store %arg2[%c4, %45, %c0_12], %48 {strides = array<i32>} : memref<9x2x128xf32, #tpu.memory_space<vmem>>, vector<1x2x128xf32>,
    %49 = arith.mulf %19, %20 : vector<2x128xf32>
    %cst_13 = arith.constant 1.73205078 : f32
    %50 = vector.broadcast %cst_13 : f32 to vector<2x128xf32>
    %51 = arith.mulf %50, %49 : vector<2x128xf32>
    %c5 = arith.constant 5 : index
    %52 = arith.index_cast %1 : i32 to index
    %c0_14 = arith.constant 0 : index
    %53 = vector.load %arg2[%c5, %52, %c0_14] : memref<9x2x128xf32, #tpu.memory_space<vmem>>, vector<1x2x128xf32>
    %54 = vector.shape_cast %53 : vector<1x2x128xf32> to vector<2x128xf32>
    %55 = vector.shape_cast %51 : vector<2x128xf32> to vector<1x2x128xf32>
    tpu.vector_store %arg2[%c5, %52, %c0_14], %55 {strides = array<i32>} : memref<9x2x128xf32, #tpu.memory_space<vmem>>, vector<1x2x128xf32>,
    %56 = arith.addf %22, %24 : vector<2x128xf32>
    %cst_15 = arith.constant 5.000000e-01 : f32
    %57 = vector.broadcast %cst_15 : f32 to vector<2x128xf32>
    %58 = arith.mulf %57, %56 : vector<2x128xf32>
    %59 = arith.subf %23, %58 : vector<2x128xf32>
    %c6 = arith.constant 6 : index
    %60 = arith.index_cast %1 : i32 to index
    %c0_16 = arith.constant 0 : index
    %61 = vector.load %arg2[%c6, %60, %c0_16] : memref<9x2x128xf32, #tpu.memory_space<vmem>>, vector<1x2x128xf32>
    %62 = vector.shape_cast %61 : vector<1x2x128xf32> to vector<2x128xf32>
    %63 = vector.shape_cast %59 : vector<2x128xf32> to vector<1x2x128xf32>
    tpu.vector_store %arg2[%c6, %60, %c0_16], %63 {strides = array<i32>} : memref<9x2x128xf32, #tpu.memory_space<vmem>>, vector<1x2x128xf32>,
    %64 = arith.mulf %20, %21 : vector<2x128xf32>
    %cst_17 = arith.constant 1.73205078 : f32
    %65 = vector.broadcast %cst_17 : f32 to vector<2x128xf32>
    %66 = arith.mulf %65, %64 : vector<2x128xf32>
    %c7 = arith.constant 7 : index
    %67 = arith.index_cast %1 : i32 to index
    %c0_18 = arith.constant 0 : index
    %68 = vector.load %arg2[%c7, %67, %c0_18] : memref<9x2x128xf32, #tpu.memory_space<vmem>>, vector<1x2x128xf32>
    %69 = vector.shape_cast %68 : vector<1x2x128xf32> to vector<2x128xf32>
    %70 = vector.shape_cast %66 : vector<2x128xf32> to vector<1x2x128xf32>
    tpu.vector_store %arg2[%c7, %67, %c0_18], %70 {strides = array<i32>} : memref<9x2x128xf32, #tpu.memory_space<vmem>>, vector<1x2x128xf32>,
    %71 = arith.subf %24, %22 : vector<2x128xf32>
    %cst_19 = arith.constant 0.866025388 : f32
    %72 = vector.broadcast %cst_19 : f32 to vector<2x128xf32>
    %73 = arith.mulf %72, %71 : vector<2x128xf32>
    %c8 = arith.constant 8 : index
    %74 = arith.index_cast %1 : i32 to index
    %c0_20 = arith.constant 0 : index
    %75 = vector.load %arg2[%c8, %74, %c0_20] : memref<9x2x128xf32, #tpu.memory_space<vmem>>, vector<1x2x128xf32>
    %76 = vector.shape_cast %75 : vector<1x2x128xf32> to vector<2x128xf32>
    %77 = vector.shape_cast %73 : vector<2x128xf32> to vector<1x2x128xf32>
    tpu.vector_store %arg2[%c8, %74, %c0_20], %77 {strides = array<i32>} : memref<9x2x128xf32, #tpu.memory_space<vmem>>, vector<1x2x128xf32>,
    %c1_i32 = arith.constant 1 : i32
    return
  }
  func.func @transform_0(%arg0: i32) -> (i32, i32, i32) {
    %c0_i32 = arith.constant 0 : i32
    %c0_i32_0 = arith.constant 0 : i32
    %c0_i32_1 = arith.constant 0 : i32
    return %c0_i32, %arg0, %c0_i32_0 : i32, i32, i32
  }
  func.func @transform_1(%arg0: i32) -> (i32, i32, i32) {
    %c0_i32 = arith.constant 0 : i32
    %c0_i32_0 = arith.constant 0 : i32
    %c0_i32_1 = arith.constant 0 : i32
    return %c0_i32, %arg0, %c0_i32_0 : i32, i32, i32
  }
}

</mosaic_0001>

<llo_original>
// kernel: sub.3
$region0: #{sub.3}
  #allocation0 [shape = 's32[1]{0}', space=sflag, size = 0x4, scoped, tag = 'scoped memory for sub.3']
  %s0 = inlined_call_operand.vmem [shape: f32[256,3], index: 0, kind: input, shape index: {}]
  %s1 = inlined_call_operand.vmem [shape: f32[256,3], index: 1, kind: input, shape index: {}]
  %s2 = inlined_call_operand.vmem [shape: f32[256,3], index: 2, kind: output, shape index: {}]
  %v3 = vld [vmem:[%s0] sm:$0xff]
  %v4 = vld [vmem:[%s1] sm:$0xff]
  %5 = xla_tuple %v3, %v4
  %6 = xla_tuple %5
  %v7 = vsub.f32 %v3, %v4
  %8 = xla_tuple %v7
  %9 = vst [vmem:[%s2] sm:$0xff] %v7
  %s10 = scalar_lea.vmem %s0, 8
  %v11 = vld [vmem:[%s10] sm:$0xff]
  %s12 = scalar_lea.vmem %s1, 8
  %v13 = vld [vmem:[%s12] sm:$0xff]
  %14 = xla_tuple %v11, %v13
  %15 = xla_tuple %14
  %v16 = vsub.f32 %v11, %v13
  %17 = xla_tuple %v16
  %s18 = scalar_lea.vmem %s2, 8
  %19 = vst [vmem:[%s18] sm:$0xff] %v16
  %s20 = scalar_lea.vmem %s0, 16
  %v21 = vld [vmem:[%s20] sm:$0xff]
  %s22 = scalar_lea.vmem %s1, 16
  %v23 = vld [vmem:[%s22] sm:$0xff]
  %24 = xla_tuple %v21, %v23
  %25 = xla_tuple %24
  %v26 = vsub.f32 %v21, %v23
  %27 = xla_tuple %v26
  %s28 = scalar_lea.vmem %s2, 16
  %29 = vst [vmem:[%s28] sm:$0xff] %v26
  %s30 = scalar_lea.vmem %s0, 24
  %v31 = vld [vmem:[%s30] sm:$0xff]
  %s32 = scalar_lea.vmem %s1, 24
  %v33 = vld [vmem:[%s32] sm:$0xff]
  %34 = xla_tuple %v31, %v33
  %35 = xla_tuple %34
  %v36 = vsub.f32 %v31, %v33
  %37 = xla_tuple %v36
  %s38 = scalar_lea.vmem %s2, 24
  %39 = vst [vmem:[%s38] sm:$0xff] %v36
  %s40 = scalar_lea.vmem %s0, 32
  %v41 = vld [vmem:[%s40] sm:$0xff]
  %s42 = scalar_lea.vmem %s1, 32
  %v43 = vld [vmem:[%s42] sm:$0xff]
  %44 = xla_tuple %v41, %v43
  %45 = xla_tuple %44
  %v46 = vsub.f32 %v41, %v43
  %47 = xla_tuple %v46
  %s48 = scalar_lea.vmem %s2, 32
  %49 = vst [vmem:[%s48] sm:$0xff] %v46
  %s50 = scalar_lea.vmem %s0, 40
  %v51 = vld [vmem:[%s50] sm:$0xff]
  %s52 = scalar_lea.vmem %s1, 40
  %v53 = vld [vmem:[%s52] sm:$0xff]
  %54 = xla_tuple %v51, %v53
  %55 = xla_tuple %54
  %v56 = vsub.f32 %v51, %v53
  %57 = xla_tuple %v56
  %s58 = scalar_lea.vmem %s2, 40
  %59 = vst [vmem:[%s58] sm:$0xff] %v56
  %s60 = scalar_lea.vmem %s0, 48
  %v61 = vld [vmem:[%s60] sm:$0xff]
  %s62 = scalar_lea.vmem %s1, 48
  %v63 = vld [vmem:[%s62] sm:$0xff]
  %64 = xla_tuple %v61, %v63
  %65 = xla_tuple %64
  %v66 = vsub.f32 %v61, %v63
  %67 = xla_tuple %v66
  %s68 = scalar_lea.vmem %s2, 48
  %69 = vst [vmem:[%s68] sm:$0xff] %v66
  %s70 = scalar_lea.vmem %s0, 56
  %v71 = vld [vmem:[%s70] sm:$0xff]
  %s72 = scalar_lea.vmem %s1, 56
  %v73 = vld [vmem:[%s72] sm:$0xff]
  %74 = xla_tuple %v71, %v73
  %75 = xla_tuple %74
  %v76 = vsub.f32 %v71, %v73
  %77 = xla_tuple %v76
  %s78 = scalar_lea.vmem %s2, 56
  %79 = vst [vmem:[%s78] sm:$0xff] %v76
  %s80 = scalar_lea.vmem %s0, 64
  %v81 = vld [vmem:[%s80] sm:$0xff]
  %s82 = scalar_lea.vmem %s1, 64
  %v83 = vld [vmem:[%s82] sm:$0xff]
  %84 = xla_tuple %v81, %v83
  %85 = xla_tuple %84
  %v86 = vsub.f32 %v81, %v83
  %87 = xla_tuple %v86
  %s88 = scalar_lea.vmem %s2, 64
  %89 = vst [vmem:[%s88] sm:$0xff] %v86
  %s90 = scalar_lea.vmem %s0, 72
  %v91 = vld [vmem:[%s90] sm:$0xff]
  %s92 = scalar_lea.vmem %s1, 72
  %v93 = vld [vmem:[%s92] sm:$0xff]
  %94 = xla_tuple %v91, %v93
  %95 = xla_tuple %94
  %v96 = vsub.f32 %v91, %v93
  %97 = xla_tuple %v96
  %s98 = scalar_lea.vmem %s2, 72
  %99 = vst [vmem:[%s98] sm:$0xff] %v96
  %s100 = scalar_lea.vmem %s0, 80
  %v101 = vld [vmem:[%s100] sm:$0xff]
  %s102 = scalar_lea.vmem %s1, 80
  %v103 = vld [vmem:[%s102] sm:$0xff]
  %104 = xla_tuple %v101, %v103
  %105 = xla_tuple %104
  %v106 = vsub.f32 %v101, %v103
  %107 = xla_tuple %v106
  %s108 = scalar_lea.vmem %s2, 80
  %109 = vst [vmem:[%s108] sm:$0xff] %v106
  %s110 = scalar_lea.vmem %s0, 88
  %v111 = vld [vmem:[%s110] sm:$0xff]
  %s112 = scalar_lea.vmem %s1, 88
  %v113 = vld [vmem:[%s112] sm:$0xff]
  %114 = xla_tuple %v111, %v113
  %115 = xla_tuple %114
  %v116 = vsub.f32 %v111, %v113
  %117 = xla_tuple %v116
  %s118 = scalar_lea.vmem %s2, 88
  %119 = vst [vmem:[%s118] sm:$0xff] %v116
  %s120 = scalar_lea.vmem %s0, 96
  %v121 = vld [vmem:[%s120] sm:$0xff]
  %s122 = scalar_lea.vmem %s1, 96
  %v123 = vld [vmem:[%s122] sm:$0xff]
  %124 = xla_tuple %v121, %v123
  %125 = xla_tuple %124
  %v126 = vsub.f32 %v121, %v123
  %127 = xla_tuple %v126
  %s128 = scalar_lea.vmem %s2, 96
  %129 = vst [vmem:[%s128] sm:$0xff] %v126
  %s130 = scalar_lea.vmem %s0, 104
  %v131 = vld [vmem:[%s130] sm:$0xff]
  %s132 = scalar_lea.vmem %s1, 104
  %v133 = vld [vmem:[%s132] sm:$0xff]
  %134 = xla_tuple %v131, %v133
  %135 = xla_tuple %134
  %v136 = vsub.f32 %v131, %v133
  %137 = xla_tuple %v136
  %s138 = scalar_lea.vmem %s2, 104
  %139 = vst [vmem:[%s138] sm:$0xff] %v136
  %s140 = scalar_lea.vmem %s0, 112
  %v141 = vld [vmem:[%s140] sm:$0xff]
  %s142 = scalar_lea.vmem %s1, 112
  %v143 = vld [vmem:[%s142] sm:$0xff]
  %144 = xla_tuple %v141, %v143
  %145 = xla_tuple %144
  %v146 = vsub.f32 %v141, %v143
  %147 = xla_tuple %v146
  %s148 = scalar_lea.vmem %s2, 112
  %149 = vst [vmem:[%s148] sm:$0xff] %v146
  %s150 = scalar_lea.vmem %s0, 120
  %v151 = vld [vmem:[%s150] sm:$0xff]
  %s152 = scalar_lea.vmem %s1, 120
  %v153 = vld [vmem:[%s152] sm:$0xff]
  %154 = xla_tuple %v151, %v153
  %155 = xla_tuple %154
  %v156 = vsub.f32 %v151, %v153
  %157 = xla_tuple %v156
  %s158 = scalar_lea.vmem %s2, 120
  %159 = vst [vmem:[%s158] sm:$0xff] %v156
  %s160 = scalar_lea.vmem %s0, 128
  %v161 = vld [vmem:[%s160] sm:$0xff]
  %s162 = scalar_lea.vmem %s1, 128
  %v163 = vld [vmem:[%s162] sm:$0xff]
  %164 = xla_tuple %v161, %v163
  %165 = xla_tuple %164
  %v166 = vsub.f32 %v161, %v163
  %167 = xla_tuple %v166
  %s168 = scalar_lea.vmem %s2, 128
  %169 = vst [vmem:[%s168] sm:$0xff] %v166
  %s170 = scalar_lea.vmem %s0, 136
  %v171 = vld [vmem:[%s170] sm:$0xff]
  %s172 = scalar_lea.vmem %s1, 136
  %v173 = vld [vmem:[%s172] sm:$0xff]
  %174 = xla_tuple %v171, %v173
  %175 = xla_tuple %174
  %v176 = vsub.f32 %v171, %v173
  %177 = xla_tuple %v176
  %s178 = scalar_lea.vmem %s2, 136
  %179 = vst [vmem:[%s178] sm:$0xff] %v176
  %s180 = scalar_lea.vmem %s0, 144
  %v181 = vld [vmem:[%s180] sm:$0xff]
  %s182 = scalar_lea.vmem %s1, 144
  %v183 = vld [vmem:[%s182] sm:$0xff]
  %184 = xla_tuple %v181, %v183
  %185 = xla_tuple %184
  %v186 = vsub.f32 %v181, %v183
  %187 = xla_tuple %v186
  %s188 = scalar_lea.vmem %s2, 144
  %189 = vst [vmem:[%s188] sm:$0xff] %v186
  %s190 = scalar_lea.vmem %s0, 152
  %v191 = vld [vmem:[%s190] sm:$0xff]
  %s192 = scalar_lea.vmem %s1, 152
  %v193 = vld [vmem:[%s192] sm:$0xff]
  %194 = xla_tuple %v191, %v193
  %195 = xla_tuple %194
  %v196 = vsub.f32 %v191, %v193
  %197 = xla_tuple %v196
  %s198 = scalar_lea.vmem %s2, 152
  %199 = vst [vmem:[%s198] sm:$0xff] %v196
  %s200 = scalar_lea.vmem %s0, 160
  %v201 = vld [vmem:[%s200] sm:$0xff]
  %s202 = scalar_lea.vmem %s1, 160
  %v203 = vld [vmem:[%s202] sm:$0xff]
  %204 = xla_tuple %v201, %v203
  %205 = xla_tuple %204
  %v206 = vsub.f32 %v201, %v203
  %207 = xla_tuple %v206
  %s208 = scalar_lea.vmem %s2, 160
  %209 = vst [vmem:[%s208] sm:$0xff] %v206
  %s210 = scalar_lea.vmem %s0, 168
  %v211 = vld [vmem:[%s210] sm:$0xff]
  %s212 = scalar_lea.vmem %s1, 168
  %v213 = vld [vmem:[%s212] sm:$0xff]
  %214 = xla_tuple %v211, %v213
  %215 = xla_tuple %214
  %v216 = vsub.f32 %v211, %v213
  %217 = xla_tuple %v216
  %s218 = scalar_lea.vmem %s2, 168
  %219 = vst [vmem:[%s218] sm:$0xff] %v216
  %s220 = scalar_lea.vmem %s0, 176
  %v221 = vld [vmem:[%s220] sm:$0xff]
  %s222 = scalar_lea.vmem %s1, 176
  %v223 = vld [vmem:[%s222] sm:$0xff]
  %224 = xla_tuple %v221, %v223
  %225 = xla_tuple %224
  %v226 = vsub.f32 %v221, %v223
  %227 = xla_tuple %v226
  %s228 = scalar_lea.vmem %s2, 176
  %229 = vst [vmem:[%s228] sm:$0xff] %v226
  %s230 = scalar_lea.vmem %s0, 184
  %v231 = vld [vmem:[%s230] sm:$0xff]
  %s232 = scalar_lea.vmem %s1, 184
  %v233 = vld [vmem:[%s232] sm:$0xff]
  %234 = xla_tuple %v231, %v233
  %235 = xla_tuple %234
  %v236 = vsub.f32 %v231, %v233
  %237 = xla_tuple %v236
  %s238 = scalar_lea.vmem %s2, 184
  %239 = vst [vmem:[%s238] sm:$0xff] %v236
  %s240 = scalar_lea.vmem %s0, 192
  %v241 = vld [vmem:[%s240] sm:$0xff]
  %s242 = scalar_lea.vmem %s1, 192
  %v243 = vld [vmem:[%s242] sm:$0xff]
  %244 = xla_tuple %v241, %v243
  %245 = xla_tuple %244
  %v246 = vsub.f32 %v241, %v243
  %247 = xla_tuple %v246
  %s248 = scalar_lea.vmem %s2, 192
  %249 = vst [vmem:[%s248] sm:$0xff] %v246
  %s250 = scalar_lea.vmem %s0, 200
  %v251 = vld [vmem:[%s250] sm:$0xff]
  %s252 = scalar_lea.vmem %s1, 200
  %v253 = vld [vmem:[%s252] sm:$0xff]
  %254 = xla_tuple %v251, %v253
  %255 = xla_tuple %254
  %v256 = vsub.f32 %v251, %v253
  %257 = xla_tuple %v256
  %s258 = scalar_lea.vmem %s2, 200
  %259 = vst [vmem:[%s258] sm:$0xff] %v256
  %s260 = scalar_lea.vmem %s0, 208
  %v261 = vld [vmem:[%s260] sm:$0xff]
  %s262 = scalar_lea.vmem %s1, 208
  %v263 = vld [vmem:[%s262] sm:$0xff]
  %264 = xla_tuple %v261, %v263
  %265 = xla_tuple %264
  %v266 = vsub.f32 %v261, %v263
  %267 = xla_tuple %v266
  %s268 = scalar_lea.vmem %s2, 208
  %269 = vst [vmem:[%s268] sm:$0xff] %v266
  %s270 = scalar_lea.vmem %s0, 216
  %v271 = vld [vmem:[%s270] sm:$0xff]
  %s272 = scalar_lea.vmem %s1, 216
  %v273 = vld [vmem:[%s272] sm:$0xff]
  %274 = xla_tuple %v271, %v273
  %275 = xla_tuple %274
  %v276 = vsub.f32 %v271, %v273
  %277 = xla_tuple %v276
  %s278 = scalar_lea.vmem %s2, 216
  %279 = vst [vmem:[%s278] sm:$0xff] %v276
  %s280 = scalar_lea.vmem %s0, 224
  %v281 = vld [vmem:[%s280] sm:$0xff]
  %s282 = scalar_lea.vmem %s1, 224
  %v283 = vld [vmem:[%s282] sm:$0xff]
  %284 = xla_tuple %v281, %v283
  %285 = xla_tuple %284
  %v286 = vsub.f32 %v281, %v283
  %287 = xla_tuple %v286
  %s288 = scalar_lea.vmem %s2, 224
  %289 = vst [vmem:[%s288] sm:$0xff] %v286
  %s290 = scalar_lea.vmem %s0, 232
  %v291 = vld [vmem:[%s290] sm:$0xff]
  %s292 = scalar_lea.vmem %s1, 232
  %v293 = vld [vmem:[%s292] sm:$0xff]
  %294 = xla_tuple %v291, %v293
  %295 = xla_tuple %294
  %v296 = vsub.f32 %v291, %v293
  %297 = xla_tuple %v296
  %s298 = scalar_lea.vmem %s2, 232
  %299 = vst [vmem:[%s298] sm:$0xff] %v296
  %s300 = scalar_lea.vmem %s0, 240
  %v301 = vld [vmem:[%s300] sm:$0xff]
  %s302 = scalar_lea.vmem %s1, 240
  %v303 = vld [vmem:[%s302] sm:$0xff]
  %304 = xla_tuple %v301, %v303
  %305 = xla_tuple %304
  %v306 = vsub.f32 %v301, %v303
  %307 = xla_tuple %v306
  %s308 = scalar_lea.vmem %s2, 240
  %309 = vst [vmem:[%s308] sm:$0xff] %v306
  %s310 = scalar_lea.vmem %s0, 248
  %v311 = vld [vmem:[%s310] sm:$0xff]
  %s312 = scalar_lea.vmem %s1, 248
  %v313 = vld [vmem:[%s312] sm:$0xff]
  %314 = xla_tuple %v311, %v313
  %315 = xla_tuple %314
  %v316 = vsub.f32 %v311, %v313
  %317 = xla_tuple %v316
  %s318 = scalar_lea.vmem %s2, 248
  %319 = vst [vmem:[%s318] sm:$0xff] %v316

// kernel: spherical_harmonic_edge_angular_attrs.1
$region0: #{spherical_harmonic_edge_angular_attrs.1}
  #allocation0 [shape = 'u32[]', space=smem, size = 0x4, offset = 0x4, fixed_abs, tag = 'smem constant byte address 0x4 - core index']
  #allocation1 [shape = 'u32[144,128]{1,0:T(1,128)}', space=vmem, size = 0x12000, scoped, tag = 'internal scratch']
  %s0 = inlined_call_operand.vmem [shape: f32[3,2,128], index: 0, kind: input, shape index: {}]
  %s1 = inlined_call_operand.vmem [shape: f32[9,2,128], index: 1, kind: output, shape index: {}]
  %s2 = sld [smem:[#allocation0]]
  $region14: #{spherical_harmonic_edge_angular_attrs.1} parent=0
    _
  %s4 = ssub.s32 1, %s2
  %s5 = scalar_select 0, %s4, %s2
  // Predicated region
  $region2: #{spherical_harmonic_edge_angular_attrs.1} parent=0 // pred_check
    _
  $region3: #{spherical_harmonic_edge_angular_attrs.1} parent=0 // pred_check_branch
    %7 = sbr.rel (0) target = $region5
  $region4: #{spherical_harmonic_edge_angular_attrs.1} parent=0 // pred_region
    _
  $region5: #{spherical_harmonic_edge_angular_attrs.1} parent=0 // pred_fallthru
    _
  %v8 = vld [vmem:[%s0] sm:$0x3]
  %s9 = sadd.s32 0, 2
  %s10 = scalar_lea.vmem %s0, %s9
  %v11 = vld [vmem:[%s10] sm:$0x3]
  %s12 = sadd.s32 0, 4
  %s13 = scalar_lea.vmem %s0, %s12
  %v14 = vld [vmem:[%s13] sm:$0x3]
  %v15 = vmul.f32 %v8, %v8
  %v16 = vmul.f32 %v11, %v11
  %v17 = vadd.f32 %v15, %v16
  %v18 = vmul.f32 %v14, %v14
  %v19 = vadd.f32 %v17, %v18
  %v20 = vmax.f32 %v19, 1e-24
  %v21 = vrsqrt.pop %v20
  %v22 = vmul.f32 %v8, %v21
  %v23 = vmul.f32 %v11, %v21
  %v24 = vmul.f32 %v14, %v21
  %v25 = vmul.f32 %v22, %v22
  %v26 = vmul.f32 %v23, %v23
  %v27 = vmul.f32 %v24, %v24
  %28 = vst [vmem:[%s1] sm:$0x3] 1.0
  %s29 = scalar_lea.vmem %s1, %s9
  %30 = vst [vmem:[%s29] sm:$0x3] %v22
  %s31 = scalar_lea.vmem %s1, %s12
  %32 = vst [vmem:[%s31] sm:$0x3] %v23
  %s33 = sadd.s32 0, 6
  %s34 = scalar_lea.vmem %s1, %s33
  %35 = vst [vmem:[%s34] sm:$0x3] %v24
  %v36 = vmul.f32 %v22, %v24
  %v37 = vmul.f32 %v36, 1.7320508
  %s38 = sadd.s32 0, 8
  %s39 = scalar_lea.vmem %s1, %s38
  %40 = vst [vmem:[%s39] sm:$0x3] %v37
  %v41 = vmul.f32 %v22, %v23
  %v42 = vmul.f32 %v41, 1.7320508
  %s43 = sadd.s32 0, 10
  %s44 = scalar_lea.vmem %s1, %s43
  %45 = vst [vmem:[%s44] sm:$0x3] %v42
  %v46 = vadd.f32 %v25, %v27
  %v47 = vmul.f32 %v46, 0.5
  %v48 = vsub.f32 %v26, %v47
  %s49 = sadd.s32 0, 12
  %s50 = scalar_lea.vmem %s1, %s49
  %51 = vst [vmem:[%s50] sm:$0x3] %v48
  %v52 = vmul.f32 %v23, %v24
  %v53 = vmul.f32 %v52, 1.7320508
  %s54 = sadd.s32 0, 14
  %s55 = scalar_lea.vmem %s1, %s54
  %56 = vst [vmem:[%s55] sm:$0x3] %v53
  %v57 = vsub.f32 %v27, %v25
  %v58 = vmul.f32 %v57, 0.8660254
  %s59 = sadd.s32 0, 16
  %s60 = scalar_lea.vmem %s1, %s59
  %61 = vst [vmem:[%s60] sm:$0x3] %v58
  // Predicated region
  $region6: #{spherical_harmonic_edge_angular_attrs.1} parent=0 // pred_check
    _
  $region7: #{spherical_harmonic_edge_angular_attrs.1} parent=0 // pred_check_branch
    %63 = sbr.rel (0) target = $region9
  $region8: #{spherical_harmonic_edge_angular_attrs.1} parent=0 // pred_region
    _
  $region9: #{spherical_harmonic_edge_angular_attrs.1} parent=0 // pred_fallthru
    _
  // Predicated region
  $region10: #{spherical_harmonic_edge_angular_attrs.1} parent=0 // pred_check
    _
  $region11: #{spherical_harmonic_edge_angular_attrs.1} parent=0 // pred_check_branch
    %65 = sbr.rel (0) target = $region13
  $region12: #{spherical_harmonic_edge_angular_attrs.1} parent=0 // pred_region
    _
  $region13: #{spherical_harmonic_edge_angular_attrs.1} parent=0 // pred_fallthru
    _

</llo_original>
